<compile_context>
chip_gen: v6e
topology: v6e:2x2x1
jax: 0.10.0
libtpu: 0.0.40
codegen_flags: <defaults>
</compile_context>

<pallas_src>
import jax
import jax.numpy as jnp
from jax.experimental import pallas as pl
from jax.experimental.pallas import tpu as pltpu

_LANES = 128
_DEFAULT_TILE_ROWS = 4096  # 4096 * 128 * 4B = 2 MiB per f32 buffer (multiple of 8)


def _make_gaussian_kernel(neg_inv_2a2: float):
    def kernel(x_ref, o_ref):
        x = x_ref[...]
        # neg_inv_2a2 is a weak-typed Python float: math stays in x's dtype
        # (bf16 on v6e/v7x), explicit cast keeps the store dtype exact.
        o_ref[...] = jnp.exp((x * x) * neg_inv_2a2).astype(o_ref.dtype)

    return kernel


def gaussian_activation(x: jax.Array, a: float = 1.0) -> jax.Array:
    """Elementwise exp(-0.5 * x^2 / a^2), matching the PyTorch module."""
    orig_shape = x.shape
    orig_dtype = x.dtype
    n = x.size

    # Flatten and pad only up to a multiple of 128 lanes (tiny/no copy).
    n_pad = pl.cdiv(n, _LANES) * _LANES
    x_flat = jnp.reshape(x, (-1,))
    if n_pad != n:
        x_flat = jnp.pad(x_flat, (0, n_pad - n))
    rows = n_pad // _LANES
    x2d = jnp.reshape(x_flat, (rows, _LANES))

    # Largest legal tile: either the whole slab (always a legal block shape) or
    # a big multiple-of-8 row tile; partial tail block handled by Pallas.
    if rows <= _DEFAULT_TILE_ROWS:
        tile_rows = rows
    else:
        tile_rows = _DEFAULT_TILE_ROWS

    grid = (pl.cdiv(rows, tile_rows),)
    neg_inv_2a2 = -0.5 / (float(a) * float(a))

    out2d = pl.pallas_call(
        _make_gaussian_kernel(neg_inv_2a2),
        out_shape=jax.ShapeDtypeStruct((rows, _LANES), orig_dtype),
        grid_spec=pltpu.PrefetchScalarGridSpec(
            num_scalar_prefetch=0,
            grid=grid,
            in_specs=[pl.BlockSpec((tile_rows, _LANES), lambda i: (i, 0))],
            out_specs=pl.BlockSpec((tile_rows, _LANES), lambda i: (i, 0)),
        ),
        compiler_params=pltpu.CompilerParams(
            dimension_semantics=("parallel",),
        ),
    )(x2d)

    out_flat = jnp.reshape(out2d, (-1,))
    if n_pad != n:
        out_flat = out_flat[:n]
    return jnp.reshape(out_flat, orig_shape)


if __name__ == "__main__":
    key = jax.random.PRNGKey(0)

    # NCHW, like the PyTorch module's expected conv-feature input.
    x = jax.random.normal(key, (2, 4, 16, 16), dtype=jnp.float32)
    a = 1.0
    y = jax.block_until_ready(gaussian_activation(x, a=a))
    y_ref = jnp.exp(-0.5 * x**2 / a**2)
    assert y.shape == x.shape and y.dtype == x.dtype
    assert jnp.allclose(y, y_ref, atol=1e-6, rtol=1e-6)

    # Exercise the non-multiple-of-128 / padded-tail path with a != 1.
    x2 = jax.random.normal(jax.random.PRNGKey(1), (3, 5, 7, 11), dtype=jnp.float32)
    a2 = 0.7
    y2 = jax.block_until_ready(gaussian_activation(x2, a=a2))
    y2_ref = jnp.exp(-0.5 * x2**2 / a2**2)
    assert y2.shape == x2.shape and y2.dtype == x2.dtype
    assert jnp.allclose(y2, y2_ref, atol=1e-6, rtol=1e-6)

    print("KERNEL_OK")
</pallas_src>

<mosaic_0001>
module attributes {stable_mosaic.version = 11 : i64} {
  func.func @kernel(%arg0: i32, %arg1: memref<16x128xf32, #tpu.memory_space<vmem>>, %arg2: memref<16x128xf32, #tpu.memory_space<vmem>>) attributes {dimension_semantics = [#tpu.dimension_semantics<parallel>], iteration_bounds = array<i64: 1>, scalar_prefetch = 0 : i64, scratch_operands = 0 : i64, tpu.core_type = #tpu.core_type<tc>, window_params = [{transform_indices = @transform_0, window_bounds = array<i64: 16, 128>}, {transform_indices = @transform_1, window_bounds = array<i64: 16, 128>}]} {
    %c0 = arith.constant 0 : index
    %c0_0 = arith.constant 0 : index
    %0 = vector.load %arg1[%c0, %c0_0] : memref<16x128xf32, #tpu.memory_space<vmem>>, vector<16x128xf32>
    %1 = arith.mulf %0, %0 : vector<16x128xf32>
    %cst = arith.constant -5.000000e-01 : f32
    %2 = vector.broadcast %cst : f32 to vector<16x128xf32>
    %3 = arith.mulf %1, %2 : vector<16x128xf32>
    %4 = math.exp %3 : vector<16x128xf32>
    %c0_1 = arith.constant 0 : index
    %c0_2 = arith.constant 0 : index
    %5 = vector.load %arg2[%c0_1, %c0_2] : memref<16x128xf32, #tpu.memory_space<vmem>>, vector<16x128xf32>
    tpu.vector_store %arg2[%c0_1, %c0_2], %4 {strides = array<i32>} : memref<16x128xf32, #tpu.memory_space<vmem>>, vector<16x128xf32>,
    return
  }
  func.func @transform_0(%arg0: i32) -> (i32, i32) {
    %c0_i32 = arith.constant 0 : i32
    %c0_i32_0 = arith.constant 0 : i32
    return %arg0, %c0_i32 : i32, i32
  }
  func.func @transform_1(%arg0: i32) -> (i32, i32) {
    %c0_i32 = arith.constant 0 : i32
    %c0_i32_0 = arith.constant 0 : i32
    return %arg0, %c0_i32 : i32, i32
  }
}

</mosaic_0001>

<llo_original>
// kernel: tpu_custom_call.1
$region0: #{tpu_custom_call.1}
  #allocation0 [shape = 'u32[]', space=smem, size = 0x4, offset = 0x4, fixed_abs, tag = 'smem constant byte address 0x4 - core index']
  #allocation1 [shape = 'u32[144,128]{1,0:T(1,128)}', space=vmem, size = 0x12000, scoped, tag = 'internal scratch']
  %s0 = inlined_call_operand.hbm [shape: f32[16,128], index: 0, kind: input, shape index: {}]
  %s1 = inlined_call_operand.hbm [shape: f32[16,128], index: 1, kind: output, shape index: {}]
  %s2 = sld [smem:[#allocation0]]
  $region18: #{tpu_custom_call.1} parent=0
    _
  %s4 = ssub.s32 1, %s2
  %s5 = scalar_select 0, %s4, %s2
  $region1: #{tpu_custom_call.1} parent=0
    #allocation2 [shape = 'u8[8192]{0}', space=vmem, size = 0x2000, scoped, tag = 'input window, operand 0, single buffered']
    #allocation3 [shape = 's32[1]{0}', space=sflag, size = 0x4, scoped, tag = 'scoped memory for tpu_custom_call.1']
    #allocation4 [shape = 's32[1]{0}', space=sflag, size = 0x4, scoped, tag = 'scoped memory for tpu_custom_call.1']
    #allocation5 [shape = 'u8[8192]{0}', space=vmem, size = 0x2000, scoped, tag = 'output window, operand 0, single buffered']
    %6 = vsyncpa [#allocation3], 0
    %7 = vsyncpa [#allocation4], 0
    // Predicated region
    $region2: #{tpu_custom_call.1} parent=1 // pred_check
      _
    $region3: #{tpu_custom_call.1} parent=1 // pred_check_branch
      %9 = sbr.rel (0) target = $region5
    $region4: #{tpu_custom_call.1} parent=1 // pred_region
      %s11 = ssub.s32 256, 256
      %12 = vsyncadd [#allocation3], %s11
      %s13 = sshll.u32 [#allocation2], 4
      %s14 = int_to_ptr.vmem [resolvable:$true] %s13
      %19 = dma.hbm_to_vmem [thread:$0]  %s0, 256, %s14, [#allocation3], 128, 128, 8
    $region5: #{tpu_custom_call.1} parent=1 // pred_fallthru
      _
    // Predicated region
    $region6: #{tpu_custom_call.1} parent=1 // pred_check
      _
    $region7: #{tpu_custom_call.1} parent=1 // pred_check_branch
      %21 = sbr.rel (0) target = $region9
    $region8: #{tpu_custom_call.1} parent=1 // pred_region
      %22 = dma.done [#allocation3], 256
    $region9: #{tpu_custom_call.1} parent=1 // pred_fallthru
      _
    %v23 = vld [vmem:[#allocation2] sm:$0xff]
    %v24 = vld [vmem:[#allocation2 + $0x8] sm:$0xff]
    %v25 = vmul.f32 %v23, %v23
    %v26 = vmul.f32 %v24, %v24
    %v27 = vmul.f32 %v25, -0.5
    %v28 = vmul.f32 %v26, -0.5
    %v29 = vmul.f32 %v27, 1.442695
    %v30 = vpow.pop %v29
    %v31 = vmul.f32 %v28, 1.442695
    %v32 = vpow.pop %v31
    %33 = vst [vmem:[#allocation5] sm:$0xff] %v30
    %34 = vst [vmem:[#allocation5 + $0x8] sm:$0xff] %v32
    // Predicated region
    $region10: #{tpu_custom_call.1} parent=1 // pred_check
      _
    $region11: #{tpu_custom_call.1} parent=1 // pred_check_branch
      %36 = sbr.rel (0) target = $region13
    $region12: #{tpu_custom_call.1} parent=1 // pred_region
      %s38 = ssub.s32 256, 256
      %39 = vsyncadd [#allocation4], %s38
      %s40 = sshll.u32 [#allocation5], 4
      %s41 = int_to_ptr.vmem [resolvable:$true] %s40
      %46 = dma.vmem_to_hbm [thread:$0]  %s41, 256, %s1, [#allocation4], 128, 128, 8
    $region13: #{tpu_custom_call.1} parent=1 // pred_fallthru
      _
    // Predicated region
    $region14: #{tpu_custom_call.1} parent=1 // pred_check
      _
    $region15: #{tpu_custom_call.1} parent=1 // pred_check_branch
      %48 = sbr.rel (0) target = $region17
    $region16: #{tpu_custom_call.1} parent=1 // pred_region
      %49 = dma.done [#allocation4], 256
    $region17: #{tpu_custom_call.1} parent=1 // pred_fallthru
      _
    %50 = vsyncpa [#allocation3], 1
    %51 = vsyncpa [#allocation4], 1

</llo_original>
